<compile_context>
chip_gen: v6e
topology: v6e:2x2x1
jax: 0.10.0
libtpu: 0.0.40
codegen_flags: <defaults>
</compile_context>

<pallas_src>
import functools

import jax
import jax.numpy as jnp
from jax import lax
from jax.experimental import pallas as pl
from jax.experimental.pallas import tpu as pltpu

LANE = 128      # vreg lane width
ACC_SUB = 8     # f32 sublane tile -> resident (8, 128) accumulator
TM_MAX = 4096   # rows per HBM block: 4096*128*4B = 2 MiB per f32 input block
STRIP = 512     # rows per in-kernel compute strip (temporaries ~256 KiB each)


def _cdiv(a, b):
    return (a + b - 1) // b


def _round_up(a, b):
    return _cdiv(a, b) * b


def _sublane(dtype):
    itemsize = jnp.dtype(dtype).itemsize
    if itemsize >= 4:
        return 8
    if itemsize == 2:
        return 16
    return 32


def _qfocal_kernel(pred_ref, true_ref, out_ref, *, gamma, alpha, tm, strip,
                   total, needs_mask):
    i = pl.program_id(0)

    @pl.when(i == 0)
    def _():
        out_ref[...] = jnp.zeros_like(out_ref)

    nstrips = tm // strip
    if needs_mask:
        # Element index within a strip; hoisted out of the strip loop.
        row_idx = lax.broadcasted_iota(jnp.int32, (strip, LANE), 0)
        lane_idx = lax.broadcasted_iota(jnp.int32, (strip, LANE), 1)
        elem_in_strip = row_idx * LANE + lane_idx
        block_start = i * (tm * LANE)

    def strip_body(s, carry):
        off = pl.multiple_of(s * strip, strip)
        x = pred_ref[pl.ds(off, strip), :].astype(jnp.float32)
        t = true_ref[pl.ds(off, strip), :].astype(jnp.float32)

        # Shared exp(-|x|) feeds both the stable BCE and the sigmoid (EUP).
        e = jnp.exp(-jnp.abs(x))
        bce = jnp.maximum(x, 0.0) - x * t + jnp.log1p(e)
        inv = pl.reciprocal(1.0 + e, approx=True)
        p = jnp.where(x >= 0.0, inv, e * inv)                 # sigmoid(x)

        af = (1.0 - alpha) + t * (2.0 * alpha - 1.0)          # t*a + (1-t)*(1-a)
        d = jnp.abs(t - p)
        if gamma == 1.0:
            mod = d
        elif gamma == 1.5:
            mod = d * jnp.sqrt(d)                             # d**1.5, no exp/log pow
        elif gamma == 2.0:
            mod = d * d
        else:
            mod = d ** gamma                                  # generic: exp(g*log d)
        loss = bce * af * mod

        if needs_mask:
            # Drop host-side pad zeros and garbage rows of a partial block.
            valid = total - (block_start + off * LANE)
            loss = jnp.where(elem_in_strip < valid, loss, 0.0)

        # Fold (strip, 128) into the resident (8, 128) accumulator: VPU adds only.
        out_ref[...] += loss.reshape(strip // ACC_SUB, ACC_SUB, LANE).sum(axis=0)
        return carry

    lax.fori_loop(0, nstrips, strip_body, 0, unroll=True)


def qfocal_loss(pred, true, gamma=1.5, alpha=0.25, reduction="mean"):
    """QFocalLoss with loss_fcn = BCEWithLogitsLoss. Returns an f32 scalar."""
    assert pred.shape == true.shape
    total = int(pred.size)
    assert total > 0

    pred_flat = jnp.ravel(pred)
    true_flat = jnp.ravel(true)
    if true_flat.dtype == jnp.bool_:
        true_flat = true_flat.astype(jnp.int8)   # keep it narrow; cast in-kernel

    sub = max(_sublane(pred_flat.dtype), _sublane(true_flat.dtype))
    rows0 = _cdiv(total, LANE)

    if rows0 <= STRIP:
        # Tiny input: one block covering everything (pad a few KiB at most so
        # the block exactly matches the array).
        tm = _round_up(max(rows0, sub), sub)
        strip = tm
        padded_total = tm * LANE
    else:
        # Multi-block grid.  Only pad to a lane multiple (<=127 elems) when the
        # flat size is not 128-aligned; row raggedness of the last block is
        # handled by the ragged grid + in-kernel mask (no padding copy).
        tm = min(TM_MAX, (rows0 // STRIP) * STRIP)
        strip = STRIP
        padded_total = _round_up(total, LANE)

    pad = padded_total - total
    if pad:
        # TODO(synk): for large non-128-aligned inputs this concatenate still
        # materializes a padded HBM copy; removing it needs a manual-DMA
        # (memory_space=pl.ANY) tail path.
        pred_flat = jnp.concatenate(
            [pred_flat, jnp.zeros((pad,), pred_flat.dtype)])
        true_flat = jnp.concatenate(
            [true_flat, jnp.zeros((pad,), true_flat.dtype)])

    rows = padded_total // LANE
    nblocks = _cdiv(rows, tm)
    needs_mask = (nblocks * tm * LANE) != total

    pred2 = pred_flat.reshape(rows, LANE)
    true2 = true_flat.reshape(rows, LANE)

    kernel = functools.partial(
        _qfocal_kernel, gamma=float(gamma), alpha=float(alpha), tm=tm,
        strip=strip, total=total, needs_mask=needs_mask)

    cost = pl.CostEstimate(
        flops=15 * total,
        transcendentals=4 * total,
        bytes_accessed=total * (pred2.dtype.itemsize + true2.dtype.itemsize)
        + ACC_SUB * LANE * 4,
    )

    # TODO(synk): on 2-TensorCore parts (v7x) add a leading core axis with
    # pltpu.CORE_PARALLEL to shard row blocks across both cores.
    partial_sums = pl.pallas_call(
        kernel,
        out_shape=jax.ShapeDtypeStruct((ACC_SUB, LANE), jnp.float32),
        grid_spec=pltpu.PrefetchScalarGridSpec(
            num_scalar_prefetch=0,
            grid=(nblocks,),
            in_specs=[
                pl.BlockSpec((tm, LANE), lambda i: (i, 0)),
                pl.BlockSpec((tm, LANE), lambda i: (i, 0)),
            ],
            out_specs=pl.BlockSpec((ACC_SUB, LANE), lambda i: (0, 0)),
        ),
        compiler_params=pltpu.CompilerParams(
            dimension_semantics=("arbitrary",),
            vmem_limit_bytes=32 * 1024 * 1024,
        ),
        cost_estimate=cost,
    )(pred2, true2)

    s = jnp.sum(partial_sums)   # tiny (8,128) cross-lane reduction done by XLA
    if reduction == "mean":
        return s / jnp.float32(total)
    if reduction == "sum":
        return s
    # TODO(synk): reduction='none' needs an elementwise-output kernel variant.
    raise NotImplementedError("reduction must be 'mean' or 'sum'")


def qfocal_loss_ref(pred, true, gamma=1.5, alpha=0.25):
    x = pred.astype(jnp.float32)
    t = true.astype(jnp.float32)
    bce = jnp.maximum(x, 0.0) - x * t + jnp.log1p(jnp.exp(-jnp.abs(x)))
    p = jax.nn.sigmoid(x)
    af = t * alpha + (1 - t) * (1 - alpha)
    mf = jnp.abs(t - p) ** gamma
    return jnp.mean(bce * af * mf)


if __name__ == "__main__":
    key = jax.random.PRNGKey(0)
    k1, k2, k3, k4, k5, k6 = jax.random.split(key, 6)

    # 1) NCHW, 128-aligned total (2*4*16*16 = 2048): no padding, no masking.
    pred = jax.random.normal(k1, (2, 4, 16, 16), dtype=jnp.float32)
    true = (jax.random.uniform(k2, (2, 4, 16, 16)) > 0.7).astype(jnp.float32)
    out = qfocal_loss(pred, true)
    jax.block_until_ready(out)
    ref = qfocal_loss_ref(pred, true)
    assert jnp.allclose(out, ref, rtol=5e-3, atol=1e-5), (out, ref)

    # 2) Ragged total (3*5*7*11 = 1155): small pad + in-kernel tail mask.
    pred2 = jax.random.normal(k3, (3, 5, 7, 11), dtype=jnp.float32)
    true2 = jax.random.uniform(k4, (3, 5, 7, 11), dtype=jnp.float32)
    out2 = qfocal_loss(pred2, true2)
    jax.block_until_ready(out2)
    ref2 = qfocal_loss_ref(pred2, true2)
    assert jnp.allclose(out2, ref2, rtol=5e-3, atol=1e-5), (out2, ref2)

    # 3) Larger 128-aligned slab (rows > STRIP): multi-block grid, strip loop,
    #    ragged last block masked in-kernel, zero host-side padding copies.
    pred3 = jax.random.normal(k5, (8, 3, 80, 80), dtype=jnp.float32)
    true3 = (jax.random.uniform(k6, (8, 3, 80, 80)) > 0.9).astype(jnp.float32)
    out3 = qfocal_loss(pred3, true3)
    jax.block_until_ready(out3)
    ref3 = qfocal_loss_ref(pred3, true3)
    assert jnp.allclose(out3, ref3, rtol=5e-3, atol=1e-5), (out3, ref3)

    print("KERNEL_OK")
</pallas_src>

<mosaic_0001>
module attributes {stable_mosaic.version = 11 : i64} {
  func.func @_qfocal_kernel(%arg0: i32, %arg1: memref<16x128xf32, #tpu.memory_space<vmem>>, %arg2: memref<16x128xf32, #tpu.memory_space<vmem>>, %arg3: memref<8x128xf32, #tpu.memory_space<vmem>>) attributes {dimension_semantics = [#tpu.dimension_semantics<arbitrary>], iteration_bounds = array<i64: 1>, scalar_prefetch = 0 : i64, scratch_operands = 0 : i64, tpu.core_type = #tpu.core_type<tc>, window_params = [{transform_indices = @transform_0, window_bounds = array<i64: 16, 128>}, {transform_indices = @transform_1, window_bounds = array<i64: 16, 128>}, {pipeline_mode = #tpu.pipeline_mode<synchronous>, transform_indices = @transform_2, window_bounds = array<i64: 8, 128>}]} {
    %c0_i32 = arith.constant 0 : i32
    %0 = arith.cmpi eq, %arg0, %c0_i32 : i32
    %1 = arith.extui %0 : i1 to i32
    %c0_i32_0 = arith.constant 0 : i32
    %2 = arith.cmpi ne, %1, %c0_i32_0 : i32
    scf.if %2 {
      %cst_13 = arith.constant 0.000000e+00 : f32
      %41 = vector.broadcast %cst_13 : f32 to vector<8x128xf32>
      %c0_14 = arith.constant 0 : index
      %c0_15 = arith.constant 0 : index
      %42 = vector.load %arg3[%c0_14, %c0_15] : memref<8x128xf32, #tpu.memory_space<vmem>>, vector<8x128xf32>
      tpu.vector_store %arg3[%c0_14, %c0_15], %41 {strides = array<i32>} : memref<8x128xf32, #tpu.memory_space<vmem>>, vector<8x128xf32>,
    } else {
    }
    %c0_i32_1 = arith.constant 0 : i32
    %c16_i32 = arith.constant 16 : i32
    %3 = arith.muli %c0_i32_1, %c16_i32 : i32
    %4 = tpu.assume_multiple %3, 16 : i32
    %5 = arith.index_cast %4 : i32 to index
    %c0 = arith.constant 0 : index
    %6 = vector.load %arg1[%5, %c0] : memref<16x128xf32, #tpu.memory_space<vmem>>, vector<16x128xf32>
    %7 = arith.index_cast %4 : i32 to index
    %c0_2 = arith.constant 0 : index
    %8 = vector.load %arg2[%7, %c0_2] : memref<16x128xf32, #tpu.memory_space<vmem>>, vector<16x128xf32>
    %9 = math.absf %6 : vector<16x128xf32>
    %cst = arith.constant 0.000000e+00 : f32
    %10 = vector.broadcast %cst : f32 to vector<16x128xf32>
    %11 = arith.subf %10, %9 : vector<16x128xf32>
    %12 = math.exp %11 : vector<16x128xf32>
    %cst_3 = arith.constant 0.000000e+00 : f32
    %13 = vector.broadcast %cst_3 : f32 to vector<16x128xf32>
    %14 = arith.maximumf %6, %13 : vector<16x128xf32>
    %15 = arith.mulf %6, %8 : vector<16x128xf32>
    %16 = arith.subf %14, %15 : vector<16x128xf32>
    %17 = math.log1p %12 : vector<16x128xf32>
    %18 = arith.addf %16, %17 : vector<16x128xf32>
    %cst_4 = arith.constant 1.000000e+00 : f32
    %19 = vector.broadcast %cst_4 : f32 to vector<16x128xf32>
    %20 = arith.addf %19, %12 : vector<16x128xf32>
    %21 = tpu.reciprocal %20 {approx = true} : vector<16x128xf32> -> vector<16x128xf32>
    %cst_5 = arith.constant 0.000000e+00 : f32
    %22 = vector.broadcast %cst_5 : f32 to vector<16x128xf32>
    %23 = arith.cmpf oge, %6, %22 : vector<16x128xf32>
    %24 = arith.mulf %12, %21 : vector<16x128xf32>
    %25 = arith.select %23, %21, %24 : vector<16x128xi1>, vector<16x128xf32>
    %cst_6 = arith.constant -5.000000e-01 : f32
    %26 = vector.broadcast %cst_6 : f32 to vector<16x128xf32>
    %27 = arith.mulf %8, %26 : vector<16x128xf32>
    %cst_7 = arith.constant 7.500000e-01 : f32
    %28 = vector.broadcast %cst_7 : f32 to vector<16x128xf32>
    %29 = arith.addf %28, %27 : vector<16x128xf32>
    %30 = arith.subf %8, %25 : vector<16x128xf32>
    %31 = math.absf %30 : vector<16x128xf32>
    %32 = math.sqrt %31 : vector<16x128xf32>
    %33 = arith.mulf %31, %32 : vector<16x128xf32>
    %34 = arith.mulf %18, %29 : vector<16x128xf32>
    %35 = arith.mulf %34, %33 : vector<16x128xf32>
    %c0_8 = arith.constant 0 : index
    %c0_9 = arith.constant 0 : index
    %36 = vector.load %arg3[%c0_8, %c0_9] : memref<8x128xf32, #tpu.memory_space<vmem>>, vector<8x128xf32>
    %37 = vector.shape_cast %35 : vector<16x128xf32> to vector<2x8x128xf32>
    %cst_10 = arith.constant dense<0.000000e+00> : vector<8x128xf32>
    %38 = vector.multi_reduction <add>, %37, %cst_10 [0] : vector<2x8x128xf32> to vector<8x128xf32>
    %39 = arith.addf %36, %38 : vector<8x128xf32>
    %c0_11 = arith.constant 0 : index
    %c0_12 = arith.constant 0 : index
    %40 = vector.load %arg3[%c0_11, %c0_12] : memref<8x128xf32, #tpu.memory_space<vmem>>, vector<8x128xf32>
    tpu.vector_store %arg3[%c0_11, %c0_12], %39 {strides = array<i32>} : memref<8x128xf32, #tpu.memory_space<vmem>>, vector<8x128xf32>,
    %c1_i32 = arith.constant 1 : i32
    return
  }
  func.func @transform_0(%arg0: i32) -> (i32, i32) {
    %c0_i32 = arith.constant 0 : i32
    %c0_i32_0 = arith.constant 0 : i32
    return %arg0, %c0_i32 : i32, i32
  }
  func.func @transform_1(%arg0: i32) -> (i32, i32) {
    %c0_i32 = arith.constant 0 : i32
    %c0_i32_0 = arith.constant 0 : i32
    return %arg0, %c0_i32 : i32, i32
  }
  func.func @transform_2(%arg0: i32) -> (i32, i32) {
    %c0_i32 = arith.constant 0 : i32
    %c0_i32_0 = arith.constant 0 : i32
    %c0_i32_1 = arith.constant 0 : i32
    return %c0_i32, %c0_i32_0 : i32, i32
  }
}

</mosaic_0001>

<llo_original>
// kernel: tpu_custom_call.1
$region0: #{tpu_custom_call.1}
  #allocation0 [shape = 'u32[]', space=smem, size = 0x4, offset = 0x4, fixed_abs, tag = 'smem constant byte address 0x4 - core index']
  #allocation1 [shape = 'u32[144,128]{1,0:T(1,128)}', space=vmem, size = 0x12000, scoped, tag = 'internal scratch']
  %s0 = inlined_call_operand.hbm [shape: f32[16,128], index: 0, kind: input, shape index: {}]
  %s1 = inlined_call_operand.hbm [shape: f32[16,128], index: 1, kind: input, shape index: {}]
  %s2 = inlined_call_operand.hbm [shape: f32[8,128], index: 2, kind: output, shape index: {}]
  %s3 = sld [smem:[#allocation0]]
  $region30: #{tpu_custom_call.1} parent=0
    _
  %s5 = ssub.s32 1, %s3
  %s6 = scalar_select 0, %s5, %s3
  $region1: #{tpu_custom_call.1} parent=0
    #allocation2 [shape = 'u8[8192]{0}', space=vmem, size = 0x2000, scoped, tag = 'input window, operand 0, single buffered']
    #allocation3 [shape = 's32[1]{0}', space=sflag, size = 0x4, scoped, tag = 'scoped memory for tpu_custom_call.1']
    #allocation4 [shape = 's32[1]{0}', space=sflag, size = 0x4, scoped, tag = 'scoped memory for tpu_custom_call.1']
    #allocation5 [shape = 'u8[8192]{0}', space=vmem, size = 0x2000, scoped, tag = 'input window, operand 1, single buffered']
    #allocation6 [shape = 's32[1]{0}', space=sflag, size = 0x4, scoped, tag = 'scoped memory for tpu_custom_call.1']
    #allocation7 [shape = 'u8[4096]{0}', space=vmem, size = 0x1000, scoped, tag = 'output window, operand 0, single buffered']
    %7 = vsyncpa [#allocation3], 0
    %8 = vsyncpa [#allocation6], 0
    %9 = vsyncpa [#allocation4], 0
    // Predicated region
    $region2: #{tpu_custom_call.1} parent=1 // pred_check
      _
    $region3: #{tpu_custom_call.1} parent=1 // pred_check_branch
      %11 = sbr.rel (0) target = $region5
    $region4: #{tpu_custom_call.1} parent=1 // pred_region
      %s13 = ssub.s32 256, 256
      %14 = vsyncadd [#allocation3], %s13
      %s15 = sshll.u32 [#allocation2], 4
      %s16 = int_to_ptr.vmem [resolvable:$true] %s15
      %21 = dma.hbm_to_vmem [thread:$0]  %s0, 256, %s16, [#allocation3], 128, 128, 8
    $region5: #{tpu_custom_call.1} parent=1 // pred_fallthru
      _
    // Predicated region
    $region6: #{tpu_custom_call.1} parent=1 // pred_check
      _
    $region7: #{tpu_custom_call.1} parent=1 // pred_check_branch
      %23 = sbr.rel (0) target = $region9
    $region8: #{tpu_custom_call.1} parent=1 // pred_region
      %s25 = ssub.s32 256, 256
      %26 = vsyncadd [#allocation6], %s25
      %s27 = sshll.u32 [#allocation5], 4
      %s28 = int_to_ptr.vmem [resolvable:$true] %s27
      %33 = dma.hbm_to_vmem [thread:$0]  %s1, 256, %s28, [#allocation6], 128, 128, 8
    $region9: #{tpu_custom_call.1} parent=1 // pred_fallthru
      _
    // Predicated region
    $region10: #{tpu_custom_call.1} parent=1 // pred_check
      _
    $region11: #{tpu_custom_call.1} parent=1 // pred_check_branch
      %35 = sbr.rel (0) target = $region13
    $region12: #{tpu_custom_call.1} parent=1 // pred_region
      %36 = dma.done [#allocation3], 256
    $region13: #{tpu_custom_call.1} parent=1 // pred_fallthru
      _
    // Predicated region
    $region14: #{tpu_custom_call.1} parent=1 // pred_check
      _
    $region15: #{tpu_custom_call.1} parent=1 // pred_check_branch
      %38 = sbr.rel (0) target = $region17
    $region16: #{tpu_custom_call.1} parent=1 // pred_region
      %39 = dma.done [#allocation6], 256
    $region17: #{tpu_custom_call.1} parent=1 // pred_fallthru
      _
    %p40 = scmp.eq.s32.totalorder 0, 0
    // Predicated region
    $region18: #{tpu_custom_call.1} parent=1 // pred_check
      %p41 = pneg %p40
    $region19: #{tpu_custom_call.1} parent=1 // pred_check_branch
      %43 = sbr.rel (%p41) target = $region21
    $region20: #{tpu_custom_call.1} parent=1 // pred_region
      %44 = vst [vmem:[#allocation7] sm:$0xff] 0.0
    $region21: #{tpu_custom_call.1} parent=1 // pred_fallthru
      _
    %v45 = vld [vmem:[#allocation2] sm:$0xff]
    %v46 = vld [vmem:[#allocation2 + $0x8] sm:$0xff]
    %v47 = vld [vmem:[#allocation5] sm:$0xff]
    %v48 = vld [vmem:[#allocation5 + $0x8] sm:$0xff]
    %v49 = vand.u32 2147483647, %v45
    %v50 = vand.u32 2147483647, %v46
    %v51 = vsub.f32 0.0, %v49
    %v52 = vsub.f32 0.0, %v50
    %v53 = vmul.f32 %v51, 1.442695
    %v54 = vpow.pop %v53
    %v55 = vmul.f32 %v52, 1.442695
    %v56 = vpow.pop %v55
    %v57 = vmax.f32 %v45, 0.0
    %v58 = vmax.f32 %v46, 0.0
    %v59 = vmul.f32 %v45, %v47
    %v60 = vmul.f32 %v46, %v48
    %v61 = vsub.f32 %v57, %v59
    %v62 = vsub.f32 %v58, %v60
    %v63 = vadd.f32 %v54, 1.0
    %v64 = vlog2.pop %v63
    %v65 = vmul.f32 %v64, 0.6931472
    %v66 = vmul.f32 -0.5, %v54
    %v67 = vadd.f32 %v66, 1.0
    %v68 = vmul.f32 %v67, %v54
    %v69 = vand.u32 2147483647, %v54
    %vm70 = vcmp.lt.f32.partialorder %v69, 0.0004427343
    %v71 = vsel %vm70, %v68, %v65
    %v72 = vadd.f32 %v56, 1.0
    %v73 = vlog2.pop %v72
    %v74 = vmul.f32 %v73, 0.6931472
    %v75 = vmul.f32 -0.5, %v56
    %v76 = vadd.f32 %v75, 1.0
    %v77 = vmul.f32 %v76, %v56
    %v78 = vand.u32 2147483647, %v56
    %vm79 = vcmp.lt.f32.partialorder %v78, 0.0004427343
    %v80 = vsel %vm79, %v77, %v74
    %v81 = vadd.f32 %v61, %v71
    %v82 = vadd.f32 %v62, %v80
    %v83 = vadd.f32 %v54, 1.0
    %v84 = vadd.f32 %v56, 1.0
    %v85 = vrcp.pop %v83
    %v86 = vrcp.pop %v84
    %vm87 = vcmp.ge.f32.partialorder %v45, 0.0
    %vm88 = vcmp.ge.f32.partialorder %v46, 0.0
    %v89 = vmul.f32 %v54, %v85
    %v90 = vmul.f32 %v56, %v86
    %v91 = vsel %vm87, %v85, %v89
    %v92 = vsel %vm88, %v86, %v90
    %v93 = vmul.f32 %v47, -0.5
    %v94 = vmul.f32 %v48, -0.5
    %v95 = vadd.f32 %v93, 0.75
    %v96 = vadd.f32 %v94, 0.75
    %v97 = vsub.f32 %v47, %v91
    %v98 = vsub.f32 %v48, %v92
    %v99 = vand.u32 2147483647, %v97
    %v100 = vand.u32 2147483647, %v98
    %v101 = vrsqrt.pop %v99
    %v102 = vmul.f32 %v99, %v101
    %vm103 = vcmp.eq.f32.partialorder %v99, inf
    %v104 = vsel %vm103, %v99, %v102
    %vm105 = vcmp.eq.f32.partialorder %v99, 0.0
    %v106 = vand.u32 %v99, 2147483648
    %v107 = vsel %vm105, %v106, %v104
    %v108 = vrsqrt.pop %v100
    %v109 = vmul.f32 %v100, %v108
    %vm110 = vcmp.eq.f32.partialorder %v100, inf
    %v111 = vsel %vm110, %v100, %v109
    %vm112 = vcmp.eq.f32.partialorder %v100, 0.0
    %v113 = vand.u32 %v100, 2147483648
    %v114 = vsel %vm112, %v113, %v111
    %v115 = vmul.f32 %v99, %v107
    %v116 = vmul.f32 %v100, %v114
    %v117 = vmul.f32 %v81, %v95
    %v118 = vmul.f32 %v82, %v96
    %v119 = vmul.f32 %v117, %v115
    %v120 = vmul.f32 %v118, %v116
    %v121 = vld [vmem:[#allocation7] sm:$0xff]
    %v122 = vadd.f32 %v119, %v120
    %v123 = vadd.f32 %v121, %v122
    %124 = vst [vmem:[#allocation7] sm:$0xff] %v123
    // Predicated region
    $region22: #{tpu_custom_call.1} parent=1 // pred_check
      _
    $region23: #{tpu_custom_call.1} parent=1 // pred_check_branch
      %126 = sbr.rel (0) target = $region25
    $region24: #{tpu_custom_call.1} parent=1 // pred_region
      %s128 = ssub.s32 128, 128
      %129 = vsyncadd [#allocation4], %s128
      %s131 = sshll.u32 [#allocation7], 4
      %s132 = int_to_ptr.vmem [resolvable:$true] %s131
      %134 = dma.vmem_to_hbm [thread:$0]  %s132, 128, %s2, [#allocation4]
    $region25: #{tpu_custom_call.1} parent=1 // pred_fallthru
      _
    // Predicated region
    $region26: #{tpu_custom_call.1} parent=1 // pred_check
      _
    $region27: #{tpu_custom_call.1} parent=1 // pred_check_branch
      %136 = sbr.rel (0) target = $region29
    $region28: #{tpu_custom_call.1} parent=1 // pred_region
      %137 = dma.done [#allocation4], 128
    $region29: #{tpu_custom_call.1} parent=1 // pred_fallthru
      _
    %138 = vsyncpa [#allocation3], 1
    %139 = vsyncpa [#allocation6], 1
    %140 = vsyncpa [#allocation4], 1

</llo_original>
